<compile_context>
chip_gen: v5e
topology: v5e:2x2
jax: 0.10.0
libtpu: 0.0.40
codegen_flags: <defaults>
</compile_context>

<pallas_src>
import jax
import jax.numpy as jnp
from jax.experimental import pallas as pl
from jax.experimental.pallas import tpu as pltpu


# ----------------------------------------------------------------------------
# Kernel
# ----------------------------------------------------------------------------
def basic_block_kernel(x_ref, w1_ref, s1_ref, b1_ref, w2_ref, s2_ref, b2_ref,
                       o_ref, slab1_ref, slab2_ref):
    """Fused conv3x3 -> BN -> ReLU -> conv3x3 -> BN -> +residual -> ReLU.

    x_ref    : (Nb, H, W*Cin)        f32  Nb batch elements, channels in lanes
    w1_ref   : (3*W*Cin, W*Cout)     bf16 conv1, kh taps fused into K
    s1_ref   : (1, W*Cout)           f32  folded BN1 scale (tiled over W)
    b1_ref   : (1, W*Cout)           f32  folded BN1 bias
    w2_ref   : (3*W*Cout, W*Cout)    bf16 conv2
    s2_ref   : (1, W*Cout)           f32
    b2_ref   : (1, W*Cout)           f32
    o_ref    : (Nb, H, W*Cout)       f32
    slab1_ref: (Nb, H, 3*W*Cin)      bf16 VMEM scratch: [row r-1 | row r | row r+1]
    slab2_ref: (Nb, H, 3*W*Cout)     bf16 VMEM scratch for conv2
    """
    Nb, H, L = o_ref.shape
    Lin = x_ref.shape[2]
    M = Nb * H

    xf32 = x_ref[...]                            # (Nb, H, Lin) f32, kept for residual
    xb = xf32.astype(jnp.bfloat16)               # single f32->bf16 cast per element

    # ---- stage conv1 im2row slab: lanes = [row r-1 | row r | row r+1] ------
    slab1_ref[:, :, Lin:2 * Lin] = xb                                  # center tap, aligned store
    slab1_ref[:, 0:1, 0:Lin] = jnp.zeros((Nb, 1, Lin), jnp.bfloat16)   # top pad (r-1 of row 0)
    slab1_ref[:, 1:H, 0:Lin] = xb[:, 0:H - 1, :]
    slab1_ref[:, 0:H - 1, 2 * Lin:3 * Lin] = xb[:, 1:H, :]
    slab1_ref[:, H - 1:H, 2 * Lin:3 * Lin] = jnp.zeros((Nb, 1, Lin), jnp.bfloat16)

    # ---- conv1: ONE MXU matmul, M = Nb*H, K = 3*W*Cin, f32 accumulation ----
    acc1 = jnp.dot(slab1_ref[...].reshape(M, 3 * Lin), w1_ref[...],
                   preferred_element_type=jnp.float32)                 # (M, L)

    # BN1 (folded affine) + ReLU, f32 epilogue.
    y = jnp.maximum(acc1 * s1_ref[...] + b1_ref[...], 0.0)
    yb = y.reshape(Nb, H, L).astype(jnp.bfloat16)                      # single cast

    # ---- stage conv2 slab --------------------------------------------------
    slab2_ref[:, :, L:2 * L] = yb
    slab2_ref[:, 0:1, 0:L] = jnp.zeros((Nb, 1, L), jnp.bfloat16)
    slab2_ref[:, 1:H, 0:L] = yb[:, 0:H - 1, :]
    slab2_ref[:, 0:H - 1, 2 * L:3 * L] = yb[:, 1:H, :]
    slab2_ref[:, H - 1:H, 2 * L:3 * L] = jnp.zeros((Nb, 1, L), jnp.bfloat16)

    # ---- conv2 -------------------------------------------------------------
    acc2 = jnp.dot(slab2_ref[...].reshape(M, 3 * L), w2_ref[...],
                   preferred_element_type=jnp.float32)                 # (M, L)

    # BN2 + residual (f32 x held in vregs) + ReLU, lane-dense unmasked store.
    z = acc2 * s2_ref[...] + b2_ref[...] + xf32.reshape(M, Lin)
    o_ref[...] = jnp.maximum(z, 0.0).reshape(Nb, H, L).astype(o_ref.dtype)


# ----------------------------------------------------------------------------
# One-time parameter preparation (NOT in the per-call forward path)
# ----------------------------------------------------------------------------
def _band_weights_kfused(w_oihw, width):
    """(Cout, Cin, 3, 3) conv weight -> (3*W*Cin, W*Cout) K-fused banded matrix.

    Block dy (rows [dy*W*Cin, (dy+1)*W*Cin)) multiplies input row r+dy-1:
      M[dy*W*Cin + w_in*Cin + c, w_out*Cout + co] = w[co, c, dy, dx]
      with w_in = w_out + dx - 1 (entries outside [0, width) dropped: pad=1).
    """
    cout, cin = w_oihw.shape[0], w_oihw.shape[1]
    w_t = jnp.transpose(w_oihw, (2, 3, 1, 0))          # (kh, kw, Cin, Cout)
    mats = []
    for dy in range(3):
        m = jnp.zeros((width * cin, width * cout), jnp.float32)
        for dx in range(3):
            shift = jnp.eye(width, k=1 - dx, dtype=jnp.float32)
            m = m + jnp.kron(shift, w_t[dy, dx])
        mats.append(m)
    return jnp.concatenate(mats, axis=0)               # (3*W*Cin, W*Cout)


def _fold_bn(gamma, beta, rmean, rvar, eps, width):
    """Eval-mode BatchNorm folded to per-channel affine, tiled across W lanes."""
    scale = gamma / jnp.sqrt(rvar + eps)
    bias = beta - rmean * scale
    return (jnp.tile(scale, width).reshape(1, -1),
            jnp.tile(bias, width).reshape(1, -1))


def prepare_basic_block_params(width, w1, g1, be1, rm1, rv1,
                               w2, g2, be2, rm2, rv2, eps=1e-5):
    """Call once (e.g. at model load); reuse the result for every forward call."""
    w1_b = _band_weights_kfused(w1, width).astype(jnp.bfloat16)
    w2_b = _band_weights_kfused(w2, width).astype(jnp.bfloat16)
    s1, b1 = _fold_bn(g1, be1, rm1, rv1, eps, width)
    s2, b2 = _fold_bn(g2, be2, rm2, rv2, eps, width)
    return (w1_b, s1, b1, w2_b, s2, b2)


# ----------------------------------------------------------------------------
# Forward wrapper
# ----------------------------------------------------------------------------
def _pick_batch_block(n, h, target_m=128, max_m=256):
    """Smallest divisor of n whose stacked M = d*h reaches target_m, else the
    largest divisor with d*h <= max_m (keeps accumulators/vregs from spilling)."""
    best = 1
    for d in range(1, n + 1):
        if n % d:
            continue
        if d * h <= max_m:
            best = d
        if d * h >= target_m:
            break
    return best


@jax.jit
def basic_block_apply(x_nchw, params):
    """x_nchw: (N, C, H, W) float32.  params from prepare_basic_block_params."""
    w1_b, s1, b1, w2_b, s2, b2 = params
    N, Cin, H, W = x_nchw.shape
    Lin = W * Cin
    L = w1_b.shape[1]
    Cout = L // W
    assert Cin == Cout, "downsample=None requires inplanes == planes"
    assert w1_b.shape[0] == 3 * Lin and w2_b.shape[0] == 3 * L
    assert H >= 2
    if Lin % 128 != 0 or L % 128 != 0:
        # Guard: the banded lane-dense layout only makes sense when W*C fills
        # whole 128-lane tiles (masked stores/matmuls otherwise).
        raise ValueError(f"W*C must be a multiple of 128 (got {Lin}, {L})")

    Nb = _pick_batch_block(N, H)
    grid = (N // Nb,)

    # NCHW -> (N, H, W*C).  The reshape is free; only the transpose touches HBM.
    x2d = jnp.transpose(x_nchw, (0, 2, 3, 1)).reshape(N, H, Lin)

    out2d = pl.pallas_call(
        basic_block_kernel,
        out_shape=jax.ShapeDtypeStruct((N, H, L), x_nchw.dtype),
        grid=grid,
        in_specs=[
            pl.BlockSpec((Nb, H, Lin), lambda n: (n, 0, 0)),   # x (lane-dense)
            pl.BlockSpec((3 * Lin, L), lambda n: (0, 0)),      # conv1 banded (K-fused)
            pl.BlockSpec((1, L), lambda n: (0, 0)),            # bn1 scale
            pl.BlockSpec((1, L), lambda n: (0, 0)),            # bn1 bias
            pl.BlockSpec((3 * L, L), lambda n: (0, 0)),        # conv2 banded
            pl.BlockSpec((1, L), lambda n: (0, 0)),            # bn2 scale
            pl.BlockSpec((1, L), lambda n: (0, 0)),            # bn2 bias
        ],
        out_specs=pl.BlockSpec((Nb, H, L), lambda n: (n, 0, 0)),
        scratch_shapes=[
            pltpu.VMEM((Nb, H, 3 * Lin), jnp.bfloat16),   # conv1 im2row slab
            pltpu.VMEM((Nb, H, 3 * L), jnp.bfloat16),     # conv2 im2row slab
        ],
        compiler_params=pltpu.CompilerParams(
            dimension_semantics=("parallel",)),
    )(x2d, w1_b, s1, b1, w2_b, s2, b2)

    return jnp.transpose(out2d.reshape(N, H, W, Cout), (0, 3, 1, 2))


# ----------------------------------------------------------------------------
# Plain-JAX reference (mirrors kernel numerics: bf16 conv operands, f32 accum,
# f32 BN/ReLU/residual).
# TODO(synk): bf16 conv operands deviate from a pure-f32 torch BasicBlock by up
#             to ~1e-2 relative; make the bf16 matmul path opt-in if needed.
# ----------------------------------------------------------------------------
def _reference_forward(x_nchw, w1, g1, be1, rm1, rv1, w2, g2, be2, rm2, rv2,
                       eps=1e-5):
    def conv(x, w):
        return jax.lax.conv_general_dilated(
            x.astype(jnp.bfloat16), w.astype(jnp.bfloat16),
            window_strides=(1, 1), padding=((1, 1), (1, 1)),
            dimension_numbers=("NCHW", "OIHW", "NCHW"),
            preferred_element_type=jnp.float32)

    def bn(t, g, b, rm, rv):
        scale = (g / jnp.sqrt(rv + eps)).reshape(1, -1, 1, 1)
        bias = (b - rm * (g / jnp.sqrt(rv + eps))).reshape(1, -1, 1, 1)
        return t * scale + bias

    out = jax.nn.relu(bn(conv(x_nchw, w1), g1, be1, rm1, rv1))
    out = bn(conv(out, w2), g2, be2, rm2, rv2)
    return jax.nn.relu(out + x_nchw)


if __name__ == "__main__":
    # BasicBlock(inplanes=8, planes=8, stride=1); W*C = 128 -> lane-dense tiles.
    N, C, H, W = 2, 8, 16, 16

    key = jax.random.PRNGKey(0)
    keys = jax.random.split(key, 12)

    x = jax.random.normal(keys[0], (N, C, H, W), jnp.float32)

    # conv weights: (planes, inplanes, 3, 3), no bias
    w1 = jax.random.normal(keys[1], (C, C, 3, 3), jnp.float32) * 0.1
    w2 = jax.random.normal(keys[2], (C, C, 3, 3), jnp.float32) * 0.1

    # BatchNorm (eval mode) parameters
    g1 = 1.0 + 0.1 * jax.random.normal(keys[3], (C,), jnp.float32)
    be1 = 0.1 * jax.random.normal(keys[4], (C,), jnp.float32)
    rm1 = 0.1 * jax.random.normal(keys[5], (C,), jnp.float32)
    rv1 = jnp.abs(jax.random.normal(keys[6], (C,), jnp.float32)) + 0.5
    g2 = 1.0 + 0.1 * jax.random.normal(keys[7], (C,), jnp.float32)
    be2 = 0.1 * jax.random.normal(keys[8], (C,), jnp.float32)
    rm2 = 0.1 * jax.random.normal(keys[9], (C,), jnp.float32)
    rv2 = jnp.abs(jax.random.normal(keys[10], (C,), jnp.float32)) + 0.5

    # One-time prep (banded bf16 weights + folded BN), reused across calls.
    params = jax.block_until_ready(
        prepare_basic_block_params(W, w1, g1, be1, rm1, rv1,
                                   w2, g2, be2, rm2, rv2))

    out = basic_block_apply(x, params)
    out = jax.block_until_ready(out)

    ref = _reference_forward(x, w1, g1, be1, rm1, rv1, w2, g2, be2, rm2, rv2)
    assert out.shape == (N, C, H, W)
    max_err = float(jnp.max(jnp.abs(out - ref)))
    assert jnp.allclose(out, ref, atol=2e-3, rtol=2e-3), max_err

    print("KERNEL_OK")
</pallas_src>

<mosaic_0001>
module attributes {stable_mosaic.version = 11 : i64} {
  func.func @basic_block_kernel(%arg0: i32, %arg1: memref<2x16x128xf32, #tpu.memory_space<vmem>>, %arg2: memref<384x128xbf16, #tpu.memory_space<vmem>>, %arg3: memref<1x128xf32, #tpu.memory_space<vmem>>, %arg4: memref<1x128xf32, #tpu.memory_space<vmem>>, %arg5: memref<384x128xbf16, #tpu.memory_space<vmem>>, %arg6: memref<1x128xf32, #tpu.memory_space<vmem>>, %arg7: memref<1x128xf32, #tpu.memory_space<vmem>>, %arg8: memref<2x16x128xf32, #tpu.memory_space<vmem>>, %arg9: memref<2x16x384xbf16, #tpu.memory_space<vmem>>, %arg10: memref<2x16x384xbf16, #tpu.memory_space<vmem>>) attributes {dimension_semantics = [#tpu.dimension_semantics<parallel>], iteration_bounds = array<i64: 1>, scalar_prefetch = 0 : i64, scratch_operands = 2 : i64, tpu.core_type = #tpu.core_type<tc>, window_params = [{transform_indices = @transform_0, window_bounds = array<i64: 2, 16, 128>}, {pipeline_mode = #tpu.pipeline_mode<synchronous>, transform_indices = @transform_1, window_bounds = array<i64: 384, 128>}, {pipeline_mode = #tpu.pipeline_mode<synchronous>, transform_indices = @transform_2, window_bounds = array<i64: 1, 128>}, {pipeline_mode = #tpu.pipeline_mode<synchronous>, transform_indices = @transform_3, window_bounds = array<i64: 1, 128>}, {pipeline_mode = #tpu.pipeline_mode<synchronous>, transform_indices = @transform_4, window_bounds = array<i64: 384, 128>}, {pipeline_mode = #tpu.pipeline_mode<synchronous>, transform_indices = @transform_5, window_bounds = array<i64: 1, 128>}, {pipeline_mode = #tpu.pipeline_mode<synchronous>, transform_indices = @transform_6, window_bounds = array<i64: 1, 128>}, {transform_indices = @transform_7, window_bounds = array<i64: 2, 16, 128>}]} {
    %c0 = arith.constant 0 : index
    %c0_0 = arith.constant 0 : index
    %c0_1 = arith.constant 0 : index
    %0 = vector.load %arg1[%c0, %c0_0, %c0_1] : memref<2x16x128xf32, #tpu.memory_space<vmem>>, vector<2x16x128xf32>
    %1 = arith.truncf %0 : vector<2x16x128xf32> to vector<2x16x128xbf16>
    %c0_2 = arith.constant 0 : index
    %c0_3 = arith.constant 0 : index
    %c128 = arith.constant 128 : index
    %2 = vector.load %arg9[%c0_2, %c0_3, %c128] : memref<2x16x384xbf16, #tpu.memory_space<vmem>>, vector<2x16x128xbf16>
    tpu.vector_store %arg9[%c0_2, %c0_3, %c128], %1 {strides = array<i32>} : memref<2x16x384xbf16, #tpu.memory_space<vmem>>, vector<2x16x128xbf16>,
    %cst = arith.constant 0.000000e+00 : bf16
    %3 = vector.broadcast %cst : bf16 to vector<2x1x128xbf16>
    %c0_4 = arith.constant 0 : index
    %c0_5 = arith.constant 0 : index
    %c0_6 = arith.constant 0 : index
    %4 = vector.load %arg9[%c0_4, %c0_5, %c0_6] : memref<2x16x384xbf16, #tpu.memory_space<vmem>>, vector<2x1x128xbf16>
    tpu.vector_store %arg9[%c0_4, %c0_5, %c0_6], %3 {strides = array<i32>} : memref<2x16x384xbf16, #tpu.memory_space<vmem>>, vector<2x1x128xbf16>,
    %5 = vector.extract_strided_slice %1 {offsets = [0, 0, 0], sizes = [2, 15, 128], strides = [1, 1, 1]} : vector<2x16x128xbf16> to vector<2x15x128xbf16>
    %c0_7 = arith.constant 0 : index
    %c1 = arith.constant 1 : index
    %c0_8 = arith.constant 0 : index
    %6 = vector.load %arg9[%c0_7, %c1, %c0_8] : memref<2x16x384xbf16, #tpu.memory_space<vmem>>, vector<2x15x128xbf16>
    tpu.vector_store %arg9[%c0_7, %c1, %c0_8], %5 {strides = array<i32>} : memref<2x16x384xbf16, #tpu.memory_space<vmem>>, vector<2x15x128xbf16>,
    %7 = vector.extract_strided_slice %1 {offsets = [0, 1, 0], sizes = [2, 15, 128], strides = [1, 1, 1]} : vector<2x16x128xbf16> to vector<2x15x128xbf16>
    %c0_9 = arith.constant 0 : index
    %c0_10 = arith.constant 0 : index
    %c256 = arith.constant 256 : index
    %8 = vector.load %arg9[%c0_9, %c0_10, %c256] : memref<2x16x384xbf16, #tpu.memory_space<vmem>>, vector<2x15x128xbf16>
    tpu.vector_store %arg9[%c0_9, %c0_10, %c256], %7 {strides = array<i32>} : memref<2x16x384xbf16, #tpu.memory_space<vmem>>, vector<2x15x128xbf16>,
    %cst_11 = arith.constant 0.000000e+00 : bf16
    %9 = vector.broadcast %cst_11 : bf16 to vector<2x1x128xbf16>
    %c0_12 = arith.constant 0 : index
    %c15 = arith.constant 15 : index
    %c256_13 = arith.constant 256 : index
    %10 = vector.load %arg9[%c0_12, %c15, %c256_13] : memref<2x16x384xbf16, #tpu.memory_space<vmem>>, vector<2x1x128xbf16>
    tpu.vector_store %arg9[%c0_12, %c15, %c256_13], %9 {strides = array<i32>} : memref<2x16x384xbf16, #tpu.memory_space<vmem>>, vector<2x1x128xbf16>,
    %c0_14 = arith.constant 0 : index
    %c0_15 = arith.constant 0 : index
    %c0_16 = arith.constant 0 : index
    %11 = vector.load %arg9[%c0_14, %c0_15, %c0_16] : memref<2x16x384xbf16, #tpu.memory_space<vmem>>, vector<2x16x384xbf16>
    %12 = vector.shape_cast %11 : vector<2x16x384xbf16> to vector<32x384xbf16>
    %c0_17 = arith.constant 0 : index
    %c0_18 = arith.constant 0 : index
    %13 = vector.load %arg2[%c0_17, %c0_18] : memref<384x128xbf16, #tpu.memory_space<vmem>>, vector<384x128xbf16>
    %cst_19 = arith.constant dense<0.000000e+00> : vector<32x128xf32>
    %14 = tpu.matmul %12, %13, %cst_19 {dimension_numbers = #tpu.dot_dimension_numbers<[1], [0], [0], [1], [0, 0, 1, 1], [], []>} : vector<32x384xbf16>, vector<384x128xbf16>, vector<32x128xf32> -> vector<32x128xf32>
    %c0_20 = arith.constant 0 : index
    %c0_21 = arith.constant 0 : index
    %15 = vector.load %arg3[%c0_20, %c0_21] : memref<1x128xf32, #tpu.memory_space<vmem>>, vector<1x128xf32>
    %16 = vector.broadcast %15 : vector<1x128xf32> to vector<32x128xf32>
    %17 = arith.mulf %14, %16 : vector<32x128xf32>
    %c0_22 = arith.constant 0 : index
    %c0_23 = arith.constant 0 : index
    %18 = vector.load %arg4[%c0_22, %c0_23] : memref<1x128xf32, #tpu.memory_space<vmem>>, vector<1x128xf32>
    %19 = vector.broadcast %18 : vector<1x128xf32> to vector<32x128xf32>
    %20 = arith.addf %17, %19 : vector<32x128xf32>
    %cst_24 = arith.constant 0.000000e+00 : f32
    %21 = vector.broadcast %cst_24 : f32 to vector<32x128xf32>
    %22 = arith.maximumf %20, %21 : vector<32x128xf32>
    %23 = vector.shape_cast %22 : vector<32x128xf32> to vector<2x16x128xf32>
    %24 = arith.truncf %23 : vector<2x16x128xf32> to vector<2x16x128xbf16>
    %c0_25 = arith.constant 0 : index
    %c0_26 = arith.constant 0 : index
    %c128_27 = arith.constant 128 : index
    %25 = vector.load %arg10[%c0_25, %c0_26, %c128_27] : memref<2x16x384xbf16, #tpu.memory_space<vmem>>, vector<2x16x128xbf16>
    tpu.vector_store %arg10[%c0_25, %c0_26, %c128_27], %24 {strides = array<i32>} : memref<2x16x384xbf16, #tpu.memory_space<vmem>>, vector<2x16x128xbf16>,
    %cst_28 = arith.constant 0.000000e+00 : bf16
    %26 = vector.broadcast %cst_28 : bf16 to vector<2x1x128xbf16>
    %c0_29 = arith.constant 0 : index
    %c0_30 = arith.constant 0 : index
    %c0_31 = arith.constant 0 : index
    %27 = vector.load %arg10[%c0_29, %c0_30, %c0_31] : memref<2x16x384xbf16, #tpu.memory_space<vmem>>, vector<2x1x128xbf16>
    tpu.vector_store %arg10[%c0_29, %c0_30, %c0_31], %26 {strides = array<i32>} : memref<2x16x384xbf16, #tpu.memory_space<vmem>>, vector<2x1x128xbf16>,
    %28 = vector.extract_strided_slice %24 {offsets = [0, 0, 0], sizes = [2, 15, 128], strides = [1, 1, 1]} : vector<2x16x128xbf16> to vector<2x15x128xbf16>
    %c0_32 = arith.constant 0 : index
    %c1_33 = arith.constant 1 : index
    %c0_34 = arith.constant 0 : index
    %29 = vector.load %arg10[%c0_32, %c1_33, %c0_34] : memref<2x16x384xbf16, #tpu.memory_space<vmem>>, vector<2x15x128xbf16>
    tpu.vector_store %arg10[%c0_32, %c1_33, %c0_34], %28 {strides = array<i32>} : memref<2x16x384xbf16, #tpu.memory_space<vmem>>, vector<2x15x128xbf16>,
    %30 = vector.extract_strided_slice %24 {offsets = [0, 1, 0], sizes = [2, 15, 128], strides = [1, 1, 1]} : vector<2x16x128xbf16> to vector<2x15x128xbf16>
    %c0_35 = arith.constant 0 : index
    %c0_36 = arith.constant 0 : index
    %c256_37 = arith.constant 256 : index
    %31 = vector.load %arg10[%c0_35, %c0_36, %c256_37] : memref<2x16x384xbf16, #tpu.memory_space<vmem>>, vector<2x15x128xbf16>
    tpu.vector_store %arg10[%c0_35, %c0_36, %c256_37], %30 {strides = array<i32>} : memref<2x16x384xbf16, #tpu.memory_space<vmem>>, vector<2x15x128xbf16>,
    %cst_38 = arith.constant 0.000000e+00 : bf16
    %32 = vector.broadcast %cst_38 : bf16 to vector<2x1x128xbf16>
    %c0_39 = arith.constant 0 : index
    %c15_40 = arith.constant 15 : index
    %c256_41 = arith.constant 256 : index
    %33 = vector.load %arg10[%c0_39, %c15_40, %c256_41] : memref<2x16x384xbf16, #tpu.memory_space<vmem>>, vector<2x1x128xbf16>
    tpu.vector_store %arg10[%c0_39, %c15_40, %c256_41], %32 {strides = array<i32>} : memref<2x16x384xbf16, #tpu.memory_space<vmem>>, vector<2x1x128xbf16>,
    %c0_42 = arith.constant 0 : index
    %c0_43 = arith.constant 0 : index
    %c0_44 = arith.constant 0 : index
    %34 = vector.load %arg10[%c0_42, %c0_43, %c0_44] : memref<2x16x384xbf16, #tpu.memory_space<vmem>>, vector<2x16x384xbf16>
    %35 = vector.shape_cast %34 : vector<2x16x384xbf16> to vector<32x384xbf16>
    %c0_45 = arith.constant 0 : index
    %c0_46 = arith.constant 0 : index
    %36 = vector.load %arg5[%c0_45, %c0_46] : memref<384x128xbf16, #tpu.memory_space<vmem>>, vector<384x128xbf16>
    %cst_47 = arith.constant dense<0.000000e+00> : vector<32x128xf32>
    %37 = tpu.matmul %35, %36, %cst_47 {dimension_numbers = #tpu.dot_dimension_numbers<[1], [0], [0], [1], [0, 0, 1, 1], [], []>} : vector<32x384xbf16>, vector<384x128xbf16>, vector<32x128xf32> -> vector<32x128xf32>
    %c0_48 = arith.constant 0 : index
    %c0_49 = arith.constant 0 : index
    %38 = vector.load %arg6[%c0_48, %c0_49] : memref<1x128xf32, #tpu.memory_space<vmem>>, vector<1x128xf32>
    %39 = vector.broadcast %38 : vector<1x128xf32> to vector<32x128xf32>
    %40 = arith.mulf %37, %39 : vector<32x128xf32>
    %c0_50 = arith.constant 0 : index
    %c0_51 = arith.constant 0 : index
    %41 = vector.load %arg7[%c0_50, %c0_51] : memref<1x128xf32, #tpu.memory_space<vmem>>, vector<1x128xf32>
    %42 = vector.broadcast %41 : vector<1x128xf32> to vector<32x128xf32>
    %43 = arith.addf %40, %42 : vector<32x128xf32>
    %44 = vector.shape_cast %0 : vector<2x16x128xf32> to vector<32x128xf32>
    %45 = arith.addf %43, %44 : vector<32x128xf32>
    %cst_52 = arith.constant 0.000000e+00 : f32
    %46 = vector.broadcast %cst_52 : f32 to vector<32x128xf32>
    %47 = arith.maximumf %45, %46 : vector<32x128xf32>
    %48 = vector.shape_cast %47 : vector<32x128xf32> to vector<2x16x128xf32>
    %c0_53 = arith.constant 0 : index
    %c0_54 = arith.constant 0 : index
    %c0_55 = arith.constant 0 : index
    %49 = vector.load %arg8[%c0_53, %c0_54, %c0_55] : memref<2x16x128xf32, #tpu.memory_space<vmem>>, vector<2x16x128xf32>
    tpu.vector_store %arg8[%c0_53, %c0_54, %c0_55], %48 {strides = array<i32>} : memref<2x16x128xf32, #tpu.memory_space<vmem>>, vector<2x16x128xf32>,
    return
  }
  func.func @transform_0(%arg0: i32) -> (i32, i32, i32) {
    %c0_i32 = arith.constant 0 : i32
    %c0_i32_0 = arith.constant 0 : i32
    %c0_i32_1 = arith.constant 0 : i32
    return %arg0, %c0_i32, %c0_i32_0 : i32, i32, i32
  }
  func.func @transform_1(%arg0: i32) -> (i32, i32) {
    %c0_i32 = arith.constant 0 : i32
    %c0_i32_0 = arith.constant 0 : i32
    %c0_i32_1 = arith.constant 0 : i32
    return %c0_i32, %c0_i32_0 : i32, i32
  }
  func.func @transform_2(%arg0: i32) -> (i32, i32) {
    %c0_i32 = arith.constant 0 : i32
    %c0_i32_0 = arith.constant 0 : i32
    %c0_i32_1 = arith.constant 0 : i32
    return %c0_i32, %c0_i32_0 : i32, i32
  }
  func.func @transform_3(%arg0: i32) -> (i32, i32) {
    %c0_i32 = arith.constant 0 : i32
    %c0_i32_0 = arith.constant 0 : i32
    %c0_i32_1 = arith.constant 0 : i32
    return %c0_i32, %c0_i32_0 : i32, i32
  }
  func.func @transform_4(%arg0: i32) -> (i32, i32) {
    %c0_i32 = arith.constant 0 : i32
    %c0_i32_0 = arith.constant 0 : i32
    %c0_i32_1 = arith.constant 0 : i32
    return %c0_i32, %c0_i32_0 : i32, i32
  }
  func.func @transform_5(%arg0: i32) -> (i32, i32) {
    %c0_i32 = arith.constant 0 : i32
    %c0_i32_0 = arith.constant 0 : i32
    %c0_i32_1 = arith.constant 0 : i32
    return %c0_i32, %c0_i32_0 : i32, i32
  }
  func.func @transform_6(%arg0: i32) -> (i32, i32) {
    %c0_i32 = arith.constant 0 : i32
    %c0_i32_0 = arith.constant 0 : i32
    %c0_i32_1 = arith.constant 0 : i32
    return %c0_i32, %c0_i32_0 : i32, i32
  }
  func.func @transform_7(%arg0: i32) -> (i32, i32, i32) {
    %c0_i32 = arith.constant 0 : i32
    %c0_i32_0 = arith.constant 0 : i32
    %c0_i32_1 = arith.constant 0 : i32
    return %arg0, %c0_i32, %c0_i32_0 : i32, i32, i32
  }
}

</mosaic_0001>

<llo_original>
// kernel: basic_block_apply.1
$region0: #{basic_block_apply.1}
  #allocation0 [shape = 'u32[]', space=smem, size = 0x4, offset = 0x4, fixed_abs, tag = 'smem constant byte address 0x4 - core index']
  #allocation1 [shape = 'u32[72,128]{1,0:T(1,128)}', space=vmem, size = 0x9000, scoped, tag = 'internal scratch']
  #allocation2 [shape = 'bf16[2,16,384]{2,1,0:T(8,128)(2,1)}', space=vmem, size = 0x6000, scoped, tag = 'scratch operand']
  #allocation3 [shape = 'bf16[2,16,384]{2,1,0:T(8,128)(2,1)}', space=vmem, size = 0x6000, scoped, tag = 'scratch operand']
  %s0 = inlined_call_operand.vmem [shape: f32[2,16,128], index: 0, kind: input, shape index: {}]
  %s1 = inlined_call_operand.vmem [shape: bf16[384,128], index: 1, kind: input, shape index: {}]
  %s2 = inlined_call_operand.vmem [shape: f32[1,128], index: 2, kind: input, shape index: {}]
  %s3 = inlined_call_operand.vmem [shape: f32[1,128], index: 3, kind: input, shape index: {}]
  %s4 = inlined_call_operand.vmem [shape: bf16[384,128], index: 4, kind: input, shape index: {}]
  %s5 = inlined_call_operand.vmem [shape: f32[1,128], index: 5, kind: input, shape index: {}]
  %s6 = inlined_call_operand.vmem [shape: f32[1,128], index: 6, kind: input, shape index: {}]
  %s7 = inlined_call_operand.vmem [shape: f32[2,16,128], index: 7, kind: output, shape index: {}]
  %s8 = sld [smem:[#allocation0]]
  $region38: #{basic_block_apply.1} parent=0
    _
  %s10 = ssub.s32 1, %s8
  %s11 = scalar_select 0, %s10, %s8
  // Predicated region
  $region2: #{basic_block_apply.1} parent=0 // pred_check
    _
  $region3: #{basic_block_apply.1} parent=0 // pred_check_branch
    %13 = sbr.rel (0) target = $region5
  $region4: #{basic_block_apply.1} parent=0 // pred_region
    _
  $region5: #{basic_block_apply.1} parent=0 // pred_fallthru
    _
  // Predicated region
  $region6: #{basic_block_apply.1} parent=0 // pred_check
    _
  $region7: #{basic_block_apply.1} parent=0 // pred_check_branch
    %15 = sbr.rel (0) target = $region9
  $region8: #{basic_block_apply.1} parent=0 // pred_region
    _
  $region9: #{basic_block_apply.1} parent=0 // pred_fallthru
    _
  // Predicated region
  $region10: #{basic_block_apply.1} parent=0 // pred_check
    _
  $region11: #{basic_block_apply.1} parent=0 // pred_check_branch
    %17 = sbr.rel (0) target = $region13
  $region12: #{basic_block_apply.1} parent=0 // pred_region
    _
  $region13: #{basic_block_apply.1} parent=0 // pred_fallthru
    _
  // Predicated region
  $region14: #{basic_block_apply.1} parent=0 // pred_check
    _
  $region15: #{basic_block_apply.1} parent=0 // pred_check_branch
    %19 = sbr.rel (0) target = $region17
  $region16: #{basic_block_apply.1} parent=0 // pred_region
    _
  $region17: #{basic_block_apply.1} parent=0 // pred_fallthru
    _
  // Predicated region
  $region18: #{basic_block_apply.1} parent=0 // pred_check
    _
  $region19: #{basic_block_apply.1} parent=0 // pred_check_branch
    %21 = sbr.rel (0) target = $region21
  $region20: #{basic_block_apply.1} parent=0 // pred_region
    _
  $region21: #{basic_block_apply.1} parent=0 // pred_fallthru
    _
  // Predicated region
  $region22: #{basic_block_apply.1} parent=0 // pred_check
    _
  $region23: #{basic_block_apply.1} parent=0 // pred_check_branch
    %23 = sbr.rel (0) target = $region25
  $region24: #{basic_block_apply.1} parent=0 // pred_region
    _
  $region25: #{basic_block_apply.1} parent=0 // pred_fallthru
    _
  // Predicated region
  $region26: #{basic_block_apply.1} parent=0 // pred_check
    _
  $region27: #{basic_block_apply.1} parent=0 // pred_check_branch
    %25 = sbr.rel (0) target = $region29
  $region28: #{basic_block_apply.1} parent=0 // pred_region
    _
  $region29: #{basic_block_apply.1} parent=0 // pred_fallthru
    _
  %v27 = vld [vmem:[%s0] sm:$0xff]
  %v28 = vld [vmem:[%s0 + $0x8] sm:$0xff]
  %v29 = vld [vmem:[%s0 + $0x10] sm:$0xff]
  %v30 = vld [vmem:[%s0 + $0x18] sm:$0xff]
  %v31 = vpack.c.bf16 %v27, %v27
  %v32 = vpack.c.bf16 %v28, %v28
  %v33 = vpack.c.bf16 %v29, %v29
  %v34 = vpack.c.bf16 %v30, %v30
  %35 = vst [vmem:[#allocation2 + $0x4] sm:$0xf] %v31
  %36 = vst [vmem:[#allocation2 + $0x10] sm:$0xf] %v32
  %37 = vst [vmem:[#allocation2 + $0x1c] sm:$0xf] %v33
  %38 = vst [vmem:[#allocation2 + $0x28] sm:$0xf] %v34
  %vm39 = vcmask 1040384
  %vm40 = vsmask.f32 256
  %vm41 = vmand %vm39, %vm40
  %v42 = vld [vmem:[#allocation2] sm:$0x1]
  %v43 = vsel %vm41, 0, %v42
  %44 = vst [vmem:[#allocation2] sm:$0x1] %v43
  %v45 = vld [vmem:[#allocation2 + $0x18] sm:$0x1]
  %v46 = vsel %vm41, 0, %v45
  %47 = vst [vmem:[#allocation2 + $0x18] sm:$0x1] %v46
  %vm48 = vsmask.f32 4368
  %vm49 = vmor %vm40, %vm48
  %v51 = vshrl.u32 %v31, 16
  %v53 = vrot.slane %v51, 7
  %v54 = vshll.u32 %v31, 16
  %v56 = vor.u32 %v53, %v54
  %v57 = vrot.slane %v53, 4
  %v59 = vshrl.u32 %v32, 16
  %v61 = vrot.slane %v59, 7
  %v62 = vshll.u32 %v32, 16
  %v64 = vor.u32 %v61, %v62
  %v65 = vsel %vm49, %v57, %v64
  %v67 = vshrl.u32 %v33, 16
  %v69 = vrot.slane %v67, 7
  %v70 = vshll.u32 %v33, 16
  %v72 = vor.u32 %v69, %v70
  %v73 = vrot.slane %v69, 4
  %v75 = vshrl.u32 %v34, 16
  %v77 = vrot.slane %v75, 7
  %v78 = vshll.u32 %v34, 16
  %v80 = vor.u32 %v77, %v78
  %v81 = vsel %vm49, %v73, %v80
  %vm86 = vcmask 1043456
  %vm87 = vsmask.f32 7938
  %vm88 = vmand %vm86, %vm87
  %v89 = vld [vmem:[#allocation2] sm:$0xf]
  %v90 = vsel %vm88, %v56, %v89
  %91 = vst [vmem:[#allocation2] sm:$0xf] %v90
  %92 = vst [vmem:[#allocation2 + $0xc] sm:$0xf] %v65
  %v93 = vld [vmem:[#allocation2 + $0x18] sm:$0xf]
  %v94 = vsel %vm88, %v72, %v93
  %95 = vst [vmem:[#allocation2 + $0x18] sm:$0xf] %v94
  %96 = vst [vmem:[#allocation2 + $0x24] sm:$0xf] %v81
  %vm97 = vsmask.f32 3328
  %vm98 = vsmask.f32 7440
  %vm99 = vmor %vm97, %vm98
  %v100 = vrot.slane %v51, 4
  %v101 = vrot.slane %v54, 5
  %v102 = vor.u32 %v100, %v101
  %v103 = vrot.slane %v102, 4
  %v104 = vrot.slane %v62, 5
  %v105 = vsel %vm99, %v103, %v104
  %v106 = vrot.slane %v59, 4
  %v107 = vor.u32 %v106, %v104
  %v108 = vrot.slane %v107, 4
  %v109 = vrot.slane %v67, 4
  %v110 = vrot.slane %v70, 5
  %v111 = vor.u32 %v109, %v110
  %v112 = vrot.slane %v111, 4
  %v113 = vrot.slane %v78, 5
  %v114 = vsel %vm99, %v112, %v113
  %v115 = vrot.slane %v75, 4
  %v116 = vor.u32 %v115, %v113
  %v117 = vrot.slane %v116, 4
  %122 = vst [vmem:[#allocation2 + $0x8] sm:$0xf] %v105
  %vm123 = vmand %vm86, %vm97
  %v124 = vld [vmem:[#allocation2 + $0x14] sm:$0xf]
  %v125 = vsel %vm123, %v108, %v124
  %126 = vst [vmem:[#allocation2 + $0x14] sm:$0xf] %v125
  %127 = vst [vmem:[#allocation2 + $0x20] sm:$0xf] %v114
  %v128 = vld [vmem:[#allocation2 + $0x2c] sm:$0xf]
  %v129 = vsel %vm123, %v117, %v128
  %130 = vst [vmem:[#allocation2 + $0x2c] sm:$0xf] %v129
  %vm131 = vcmask 1043459
  %vm132 = vsmask.f32 7950
  %vm133 = vmand %vm131, %vm132
  %v134 = vld [vmem:[#allocation2 + $0x14] sm:$0x8]
  %v135 = vsel %vm133, 0, %v134
  %136 = vst [vmem:[#allocation2 + $0x14] sm:$0x8] %v135
  %v137 = vld [vmem:[#allocation2 + $0x2c] sm:$0x8]
  %v138 = vsel %vm133, 0, %v137
  %139 = vst [vmem:[#allocation2 + $0x2c] sm:$0x8] %v138
  %v140 = vld [vmem:[#allocation2] sm:$0xff]
  %v141 = vld [vmem:[#allocation2 + $0x8] sm:$0xf]
  %v142 = vld [vmem:[#allocation2 + $0xc] sm:$0xff]
  %v143 = vld [vmem:[#allocation2 + $0x14] sm:$0xf]
  %v144 = vld [vmem:[#allocation2 + $0x18] sm:$0xff]
  %v145 = vld [vmem:[#allocation2 + $0x20] sm:$0xf]
  %v146 = vld [vmem:[#allocation2 + $0x24] sm:$0xff]
  %v147 = vld [vmem:[#allocation2 + $0x2c] sm:$0xf]
  %v148 = vld [vmem:[%s1] sm:$0xf]
  %v149 = vld [vmem:[%s1 + $0x4] sm:$0xf]
  %v150 = vld [vmem:[%s1 + $0x8] sm:$0xf]
  %v151 = vld [vmem:[%s1 + $0xc] sm:$0xf]
  %v152 = vld [vmem:[%s1 + $0x10] sm:$0xf]
  %v153 = vld [vmem:[%s1 + $0x14] sm:$0xf]
  %v154 = vld [vmem:[%s1 + $0x18] sm:$0xf]
  %v155 = vld [vmem:[%s1 + $0x1c] sm:$0xf]
  %v156 = vld [vmem:[%s1 + $0x20] sm:$0xf]
  %v157 = vld [vmem:[%s1 + $0x24] sm:$0xf]
  %v158 = vld [vmem:[%s1 + $0x28] sm:$0xf]
  %v159 = vld [vmem:[%s1 + $0x2c] sm:$0xf]
  %v160 = vld [vmem:[%s1 + $0x30] sm:$0xf]
  %v161 = vld [vmem:[%s1 + $0x34] sm:$0xf]
  %v162 = vld [vmem:[%s1 + $0x38] sm:$0xf]
  %v163 = vld [vmem:[%s1 + $0x3c] sm:$0xf]
  %v164 = vld [vmem:[%s1 + $0x40] sm:$0xf]
  %v165 = vld [vmem:[%s1 + $0x44] sm:$0xf]
  %v166 = vld [vmem:[%s1 + $0x48] sm:$0xf]
  %v167 = vld [vmem:[%s1 + $0x4c] sm:$0xf]
  %v168 = vld [vmem:[%s1 + $0x50] sm:$0xf]
  %v169 = vld [vmem:[%s1 + $0x54] sm:$0xf]
  %v170 = vld [vmem:[%s1 + $0x58] sm:$0xf]
  %v171 = vld [vmem:[%s1 + $0x5c] sm:$0xf]
  %v172 = vld [vmem:[%s1 + $0x60] sm:$0xf]
  %v173 = vld [vmem:[%s1 + $0x64] sm:$0xf]
  %v174 = vld [vmem:[%s1 + $0x68] sm:$0xf]
  %v175 = vld [vmem:[%s1 + $0x6c] sm:$0xf]
  %v176 = vld [vmem:[%s1 + $0x70] sm:$0xf]
  %v177 = vld [vmem:[%s1 + $0x74] sm:$0xf]
  %v178 = vld [vmem:[%s1 + $0x78] sm:$0xf]
  %v179 = vld [vmem:[%s1 + $0x7c] sm:$0xf]
  %v180 = vld [vmem:[%s1 + $0x80] sm:$0xf]
  %v181 = vld [vmem:[%s1 + $0x84] sm:$0xf]
  %v182 = vld [vmem:[%s1 + $0x88] sm:$0xf]
  %v183 = vld [vmem:[%s1 + $0x8c] sm:$0xf]
  %v184 = vld [vmem:[%s1 + $0x90] sm:$0xf]
  %v185 = vld [vmem:[%s1 + $0x94] sm:$0xf]
  %v186 = vld [vmem:[%s1 + $0x98] sm:$0xf]
  %v187 = vld [vmem:[%s1 + $0x9c] sm:$0xf]
  %v188 = vld [vmem:[%s1 + $0xa0] sm:$0xf]
  %v189 = vld [vmem:[%s1 + $0xa4] sm:$0xf]
  %v190 = vld [vmem:[%s1 + $0xa8] sm:$0xf]
  %v191 = vld [vmem:[%s1 + $0xac] sm:$0xf]
  %v192 = vld [vmem:[%s1 + $0xb0] sm:$0xf]
  %v193 = vld [vmem:[%s1 + $0xb4] sm:$0xf]
  %v194 = vld [vmem:[%s1 + $0xb8] sm:$0xf]
  %v195 = vld [vmem:[%s1 + $0xbc] sm:$0xf]
  %v204 = vunpack.c.l.b16 %v140
  %v205 = vunpack.c.h.b16 %v140
  %v206 = vunpack.c.l.b16 %v141
  %v207 = vunpack.c.l.b16 %v142
  %v208 = vunpack.c.h.b16 %v142
  %v209 = vunpack.c.l.b16 %v143
  %v210 = vunpack.c.l.b16 %v144
  %v211 = vunpack.c.h.b16 %v144
  %v212 = vunpack.c.l.b16 %v145
  %v213 = vunpack.c.l.b16 %v146
  %v214 = vunpack.c.h.b16 %v146
  %v215 = vunpack.c.l.b16 %v147
  %v216 = vpack.c.b16 %v207, %v204
  %v217 = vpack.c.b16 %v208, %v205
  %v218 = vpack.c.b16 %v209, %v206
  %v219 = vpack.c.b16 %v213, %v210
  %v220 = vpack.c.b16 %v214, %v211
  %v221 = vpack.c.b16 %v215, %v212
  %v276 = vunpack.c.l.b16 %v148
  %v277 = vunpack.c.l.b16 %v149
  %v278 = vunpack.c.l.b16 %v150
  %v279 = vunpack.c.l.b16 %v151
  %v280 = vunpack.c.l.b16 %v152
  %v281 = vunpack.c.l.b16 %v153
  %v282 = vunpack.c.l.b16 %v154
  %v283 = vunpack.c.l.b16 %v155
  %v284 = vunpack.c.l.b16 %v156
  %v285 = vunpack.c.l.b16 %v157
  %v286 = vunpack.c.l.b16 %v158
  %v287 = vunpack.c.l.b16 %v159
  %v288 = vunpack.c.l.b16 %v160
  %v289 = vunpack.c.l.b16 %v161
  %v290 = vunpack.c.l.b16 %v162
  %v291 = vunpack.c.l.b16 %v163
  %v292 = vunpack.c.l.b16 %v164
  %v293 = vunpack.c.l.b16 %v165
  %v294 = vunpack.c.l.b16 %v166
  %v295 = vunpack.c.l.b16 %v167
  %v296 = vunpack.c.l.b16 %v168
  %v297 = vunpack.c.l.b16 %v169
  %v298 = vunpack.c.l.b16 %v170
  %v299 = vunpack.c.l.b16 %v171
  %v300 = vunpack.c.l.b16 %v172
  %v301 = vunpack.c.l.b16 %v173
  %v302 = vunpack.c.l.b16 %v174
  %v303 = vunpack.c.l.b16 %v175
  %v304 = vunpack.c.l.b16 %v176
  %v305 = vunpack.c.l.b16 %v177
  %v306 = vunpack.c.l.b16 %v178
  %v307 = vunpack.c.l.b16 %v179
  %v308 = vunpack.c.l.b16 %v180
  %v309 = vunpack.c.l.b16 %v181
  %v310 = vunpack.c.l.b16 %v182
  %v311 = vunpack.c.l.b16 %v183
  %v312 = vunpack.c.l.b16 %v184
  %v313 = vunpack.c.l.b16 %v185
  %v314 = vunpack.c.l.b16 %v186
  %v315 = vunpack.c.l.b16 %v187
  %v316 = vunpack.c.l.b16 %v188
  %v317 = vunpack.c.l.b16 %v189
  %v318 = vunpack.c.l.b16 %v190
  %v319 = vunpack.c.l.b16 %v191
  %v320 = vunpack.c.l.b16 %v192
  %v321 = vunpack.c.l.b16 %v193
  %v322 = vunpack.c.l.b16 %v194
  %v323 = vunpack.c.l.b16 %v195
  %v324 = vpack.c.b16 %v277, %v276
  %v325 = vpack.c.b16 %v279, %v278
  %v326 = vpack.c.b16 %v281, %v280
  %v327 = vpack.c.b16 %v283, %v282
  %v328 = vpack.c.b16 %v285, %v284
  %v329 = vpack.c.b16 %v287, %v286
  %v330 = vpack.c.b16 %v289, %v288
  %v331 = vpack.c.b16 %v291, %v290
  %v332 = vpack.c.b16 %v293, %v292
  %v333 = vpack.c.b16 %v295, %v294
  %v334 = vpack.c.b16 %v297, %v296
  %v335 = vpack.c.b16 %v299, %v298
  %v336 = vpack.c.b16 %v301, %v300
  %v337 = vpack.c.b16 %v303, %v302
  %v338 = vpack.c.b16 %v305, %v304
  %v339 = vpack.c.b16 %v307, %v306
  %v340 = vpack.c.b16 %v309, %v308
  %v341 = vpack.c.b16 %v311, %v310
  %v342 = vpack.c.b16 %v313, %v312
  %v343 = vpack.c.b16 %v315, %v314
  %v344 = vpack.c.b16 %v317, %v316
  %v345 = vpack.c.b16 %v319, %v318
  %v346 = vpack.c.b16 %v321, %v320
  %v347 = vpack.c.b16 %v323, %v322
  %372 = vmatpush.bf16.msra.mxu0 %v331
  %373 = vmatpush.bf16.msra.mxu0 %v330
  %374 = vmatpush.bf16.msra.mxu0 %v329
  %375 = vmatpush.bf16.msra.mxu0 %v328
  %376 = vmatpush.bf16.msra.mxu0 %v327
  %377 = vmatpush.bf16.msra.mxu0 %v326
  %378 = vmatpush.bf16.msra.mxu0 %v325
  %379 = vmatpush.bf16.msra.mxu0 %v324
  %380 = vmatmul.bf16.gmra.mxu0 %v216
  %v381 = vpop.f32.mrf.mxu0
  %v382 = vadd.f32 0.0, %v381
  %v383 = vpop.f32.mrf.mxu0
  %v384 = vadd.f32 0.0, %v383
  %385 = vmatmul.bf16.gmra.mxu0 %v219
  %v386 = vpop.f32.mrf.mxu0
  %v387 = vadd.f32 0.0, %v386
  %v388 = vpop.f32.mrf.mxu0
  %v389 = vadd.f32 0.0, %v388
  %390 = vdwg.mxu0
  %391 = vmatpush.bf16.msra.mxu0 %v339
  %392 = vmatpush.bf16.msra.mxu0 %v338
  %393 = vmatpush.bf16.msra.mxu0 %v337
  %394 = vmatpush.bf16.msra.mxu0 %v336
  %395 = vmatpush.bf16.msra.mxu0 %v335
  %396 = vmatpush.bf16.msra.mxu0 %v334
  %397 = vmatpush.bf16.msra.mxu0 %v333
  %398 = vmatpush.bf16.msra.mxu0 %v332
  %399 = vmatmul.bf16.gmra.mxu0 %v217
  %v400 = vpop.f32.mrf.mxu0
  %v401 = vadd.f32 %v382, %v400
  %v402 = vpop.f32.mrf.mxu0
  %v403 = vadd.f32 %v384, %v402
  %404 = vmatmul.bf16.gmra.mxu0 %v220
  %v405 = vpop.f32.mrf.mxu0
  %v406 = vadd.f32 %v387, %v405
  %v407 = vpop.f32.mrf.mxu0
  %v408 = vadd.f32 %v389, %v407
  %409 = vdwg.mxu0
  %410 = vmatpush.bf16.msra.mxu0 %v347
  %411 = vmatpush.bf16.msra.mxu0 %v346
  %412 = vmatpush.bf16.msra.mxu0 %v345
  %413 = vmatpush.bf16.msra.mxu0 %v344
  %414 = vmatpush.bf16.msra.mxu0 %v343
  %415 = vmatpush.bf16.msra.mxu0 %v342
  %416 = vmatpush.bf16.msra.mxu0 %v341
  %417 = vmatpush.bf16.msra.mxu0 %v340
  %418 = vmatmul.bf16.gmra.mxu0 %v218
  %v419 = vpop.f32.mrf.mxu0
  %v420 = vadd.f32 %v401, %v419
  %v421 = vpop.f32.mrf.mxu0
  %v422 = vadd.f32 %v403, %v421
  %423 = vmatmul.bf16.gmra.mxu0 %v221
  %v424 = vpop.f32.mrf.mxu0
  %v425 = vadd.f32 %v406, %v424
  %v426 = vpop.f32.mrf.mxu0
  %v427 = vadd.f32 %v408, %v426
  %428 = vdwg.mxu0
  %v429 = vld [vmem:[%s2] sm:$0x1]
  %v431 = vperm.slane %v429, 0
  %v433 = vmul.f32 %v420, %v431
  %v434 = vmul.f32 %v422, %v431
  %v435 = vmul.f32 %v425, %v431
  %v436 = vmul.f32 %v427, %v431
  %v437 = vld [vmem:[%s3] sm:$0x1]
  %v439 = vperm.slane %v437, 0
  %v441 = vadd.f32 %v433, %v439
  %v442 = vadd.f32 %v434, %v439
  %v443 = vadd.f32 %v435, %v439
  %v444 = vadd.f32 %v436, %v439
  %v445 = vmax.f32 %v441, 0.0
  %v446 = vmax.f32 %v442, 0.0
  %v447 = vmax.f32 %v443, 0.0
  %v448 = vmax.f32 %v444, 0.0
  %v449 = vpack.c.bf16 %v445, %v445
  %v450 = vpack.c.bf16 %v446, %v446
  %v451 = vpack.c.bf16 %v447, %v447
  %v452 = vpack.c.bf16 %v448, %v448
  %453 = vst [vmem:[#allocation3 + $0x4] sm:$0xf] %v449
  %454 = vst [vmem:[#allocation3 + $0x10] sm:$0xf] %v450
  %455 = vst [vmem:[#allocation3 + $0x1c] sm:$0xf] %v451
  %456 = vst [vmem:[#allocation3 + $0x28] sm:$0xf] %v452
  %v457 = vld [vmem:[#allocation3] sm:$0x1]
  %v458 = vsel %vm41, 0, %v457
  %459 = vst [vmem:[#allocation3] sm:$0x1] %v458
  %v460 = vld [vmem:[#allocation3 + $0x18] sm:$0x1]
  %v461 = vsel %vm41, 0, %v460
  %462 = vst [vmem:[#allocation3 + $0x18] sm:$0x1] %v461
  %v464 = vshrl.u32 %v449, 16
  %v466 = vrot.slane %v464, 7
  %v467 = vshll.u32 %v449, 16
  %v469 = vor.u32 %v466, %v467
  %v470 = vrot.slane %v466, 4
  %v472 = vshrl.u32 %v450, 16
  %v474 = vrot.slane %v472, 7
  %v475 = vshll.u32 %v450, 16
  %v477 = vor.u32 %v474, %v475
  %v478 = vsel %vm49, %v470, %v477
  %v480 = vshrl.u32 %v451, 16
  %v482 = vrot.slane %v480, 7
  %v483 = vshll.u32 %v451, 16
  %v485 = vor.u32 %v482, %v483
  %v486 = vrot.slane %v482, 4
  %v488 = vshrl.u32 %v452, 16
  %v490 = vrot.slane %v488, 7
  %v491 = vshll.u32 %v452, 16
  %v493 = vor.u32 %v490, %v491
  %v494 = vsel %vm49, %v486, %v493
  %v499 = vld [vmem:[#allocation3] sm:$0xf]
  %v500 = vsel %vm88, %v469, %v499
  %501 = vst [vmem:[#allocation3] sm:$0xf] %v500
  %502 = vst [vmem:[#allocation3 + $0xc] sm:$0xf] %v478
  %v503 = vld [vmem:[#allocation3 + $0x18] sm:$0xf]
  %v504 = vsel %vm88, %v485, %v503
  %505 = vst [vmem:[#allocation3 + $0x18] sm:$0xf] %v504
  %506 = vst [vmem:[#allocation3 + $0x24] sm:$0xf] %v494
  %v507 = vrot.slane %v464, 4
  %v508 = vrot.slane %v467, 5
  %v509 = vor.u32 %v507, %v508
  %v510 = vrot.slane %v509, 4
  %v511 = vrot.slane %v475, 5
  %v512 = vsel %vm99, %v510, %v511
  %v513 = vrot.slane %v472, 4
  %v514 = vor.u32 %v513, %v511
  %v515 = vrot.slane %v514, 4
  %v516 = vrot.slane %v480, 4
  %v517 = vrot.slane %v483, 5
  %v518 = vor.u32 %v516, %v517
  %v519 = vrot.slane %v518, 4
  %v520 = vrot.slane %v491, 5
  %v521 = vsel %vm99, %v519, %v520
  %v522 = vrot.slane %v488, 4
  %v523 = vor.u32 %v522, %v520
  %v524 = vrot.slane %v523, 4
  %529 = vst [vmem:[#allocation3 + $0x8] sm:$0xf] %v512
  %v530 = vld [vmem:[#allocation3 + $0x14] sm:$0xf]
  %v531 = vsel %vm123, %v515, %v530
  %532 = vst [vmem:[#allocation3 + $0x14] sm:$0xf] %v531
  %533 = vst [vmem:[#allocation3 + $0x20] sm:$0xf] %v521
  %v534 = vld [vmem:[#allocation3 + $0x2c] sm:$0xf]
  %v535 = vsel %vm123, %v524, %v534
  %536 = vst [vmem:[#allocation3 + $0x2c] sm:$0xf] %v535
  %v537 = vld [vmem:[#allocation3 + $0x14] sm:$0x8]
  %v538 = vsel %vm133, 0, %v537
  %539 = vst [vmem:[#allocation3 + $0x14] sm:$0x8] %v538
  %v540 = vld [vmem:[#allocation3 + $0x2c] sm:$0x8]
  %v541 = vsel %vm133, 0, %v540
  %542 = vst [vmem:[#allocation3 + $0x2c] sm:$0x8] %v541
  %v543 = vld [vmem:[#allocation3] sm:$0xff]
  %v544 = vld [vmem:[#allocation3 + $0x8] sm:$0xf]
  %v545 = vld [vmem:[#allocation3 + $0xc] sm:$0xff]
  %v546 = vld [vmem:[#allocation3 + $0x14] sm:$0xf]
  %v547 = vld [vmem:[#allocation3 + $0x18] sm:$0xff]
  %v548 = vld [vmem:[#allocation3 + $0x20] sm:$0xf]
  %v549 = vld [vmem:[#allocation3 + $0x24] sm:$0xff]
  %v550 = vld [vmem:[#allocation3 + $0x2c] sm:$0xf]
  %v551 = vld [vmem:[%s4] sm:$0xf]
  %v552 = vld [vmem:[%s4 + $0x4] sm:$0xf]
  %v553 = vld [vmem:[%s4 + $0x8] sm:$0xf]
  %v554 = vld [vmem:[%s4 + $0xc] sm:$0xf]
  %v555 = vld [vmem:[%s4 + $0x10] sm:$0xf]
  %v556 = vld [vmem:[%s4 + $0x14] sm:$0xf]
  %v557 = vld [vmem:[%s4 + $0x18] sm:$0xf]
  %v558 = vld [vmem:[%s4 + $0x1c] sm:$0xf]
  %v559 = vld [vmem:[%s4 + $0x20] sm:$0xf]
  %v560 = vld [vmem:[%s4 + $0x24] sm:$0xf]
  %v561 = vld [vmem:[%s4 + $0x28] sm:$0xf]
  %v562 = vld [vmem:[%s4 + $0x2c] sm:$0xf]
  %v563 = vld [vmem:[%s4 + $0x30] sm:$0xf]
  %v564 = vld [vmem:[%s4 + $0x34] sm:$0xf]
  %v565 = vld [vmem:[%s4 + $0x38] sm:$0xf]
  %v566 = vld [vmem:[%s4 + $0x3c] sm:$0xf]
  %v567 = vld [vmem:[%s4 + $0x40] sm:$0xf]
  %v568 = vld [vmem:[%s4 + $0x44] sm:$0xf]
  %v569 = vld [vmem:[%s4 + $0x48] sm:$0xf]
  %v570 = vld [vmem:[%s4 + $0x4c] sm:$0xf]
  %v571 = vld [vmem:[%s4 + $0x50] sm:$0xf]
  %v572 = vld [vmem:[%s4 + $0x54] sm:$0xf]
  %v573 = vld [vmem:[%s4 + $0x58] sm:$0xf]
  %v574 = vld [vmem:[%s4 + $0x5c] sm:$0xf]
  %v575 = vld [vmem:[%s4 + $0x60] sm:$0xf]
  %v576 = vld [vmem:[%s4 + $0x64] sm:$0xf]
  %v577 = vld [vmem:[%s4 + $0x68] sm:$0xf]
  %v578 = vld [vmem:[%s4 + $0x6c] sm:$0xf]
  %v579 = vld [vmem:[%s4 + $0x70] sm:$0xf]
  %v580 = vld [vmem:[%s4 + $0x74] sm:$0xf]
  %v581 = vld [vmem:[%s4 + $0x78] sm:$0xf]
  %v582 = vld [vmem:[%s4 + $0x7c] sm:$0xf]
  %v583 = vld [vmem:[%s4 + $0x80] sm:$0xf]
  %v584 = vld [vmem:[%s4 + $0x84] sm:$0xf]
  %v585 = vld [vmem:[%s4 + $0x88] sm:$0xf]
  %v586 = vld [vmem:[%s4 + $0x8c] sm:$0xf]
  %v587 = vld [vmem:[%s4 + $0x90] sm:$0xf]
  %v588 = vld [vmem:[%s4 + $0x94] sm:$0xf]
  %v589 = vld [vmem:[%s4 + $0x98] sm:$0xf]
  %v590 = vld [vmem:[%s4 + $0x9c] sm:$0xf]
  %v591 = vld [vmem:[%s4 + $0xa0] sm:$0xf]
  %v592 = vld [vmem:[%s4 + $0xa4] sm:$0xf]
  %v593 = vld [vmem:[%s4 + $0xa8] sm:$0xf]
  %v594 = vld [vmem:[%s4 + $0xac] sm:$0xf]
  %v595 = vld [vmem:[%s4 + $0xb0] sm:$0xf]
  %v596 = vld [vmem:[%s4 + $0xb4] sm:$0xf]
  %v597 = vld [vmem:[%s4 + $0xb8] sm:$0xf]
  %v598 = vld [vmem:[%s4 + $0xbc] sm:$0xf]
  %v607 = vunpack.c.l.b16 %v543
  %v608 = vunpack.c.h.b16 %v543
  %v609 = vunpack.c.l.b16 %v544
  %v610 = vunpack.c.l.b16 %v545
  %v611 = vunpack.c.h.b16 %v545
  %v612 = vunpack.c.l.b16 %v546
  %v613 = vunpack.c.l.b16 %v547
  %v614 = vunpack.c.h.b16 %v547
  %v615 = vunpack.c.l.b16 %v548
  %v616 = vunpack.c.l.b16 %v549
  %v617 = vunpack.c.h.b16 %v549
  %v618 = vunpack.c.l.b16 %v550
  %v619 = vpack.c.b16 %v610, %v607
  %v620 = vpack.c.b16 %v611, %v608
  %v621 = vpack.c.b16 %v612, %v609
  %v622 = vpack.c.b16 %v616, %v613
  %v623 = vpack.c.b16 %v617, %v614
  %v624 = vpack.c.b16 %v618, %v615
  %v679 = vunpack.c.l.b16 %v551
  %v680 = vunpack.c.l.b16 %v552
  %v681 = vunpack.c.l.b16 %v553
  %v682 = vunpack.c.l.b16 %v554
  %v683 = vunpack.c.l.b16 %v555
  %v684 = vunpack.c.l.b16 %v556
  %v685 = vunpack.c.l.b16 %v557
  %v686 = vunpack.c.l.b16 %v558
  %v687 = vunpack.c.l.b16 %v559
  %v688 = vunpack.c.l.b16 %v560
  %v689 = vunpack.c.l.b16 %v561
  %v690 = vunpack.c.l.b16 %v562
  %v691 = vunpack.c.l.b16 %v563
  %v692 = vunpack.c.l.b16 %v564
  %v693 = vunpack.c.l.b16 %v565
  %v694 = vunpack.c.l.b16 %v566
  %v695 = vunpack.c.l.b16 %v567
  %v696 = vunpack.c.l.b16 %v568
  %v697 = vunpack.c.l.b16 %v569
  %v698 = vunpack.c.l.b16 %v570
  %v699 = vunpack.c.l.b16 %v571
  %v700 = vunpack.c.l.b16 %v572
  %v701 = vunpack.c.l.b16 %v573
  %v702 = vunpack.c.l.b16 %v574
  %v703 = vunpack.c.l.b16 %v575
  %v704 = vunpack.c.l.b16 %v576
  %v705 = vunpack.c.l.b16 %v577
  %v706 = vunpack.c.l.b16 %v578
  %v707 = vunpack.c.l.b16 %v579
  %v708 = vunpack.c.l.b16 %v580
  %v709 = vunpack.c.l.b16 %v581
  %v710 = vunpack.c.l.b16 %v582
  %v711 = vunpack.c.l.b16 %v583
  %v712 = vunpack.c.l.b16 %v584
  %v713 = vunpack.c.l.b16 %v585
  %v714 = vunpack.c.l.b16 %v586
  %v715 = vunpack.c.l.b16 %v587
  %v716 = vunpack.c.l.b16 %v588
  %v717 = vunpack.c.l.b16 %v589
  %v718 = vunpack.c.l.b16 %v590
  %v719 = vunpack.c.l.b16 %v591
  %v720 = vunpack.c.l.b16 %v592
  %v721 = vunpack.c.l.b16 %v593
  %v722 = vunpack.c.l.b16 %v594
  %v723 = vunpack.c.l.b16 %v595
  %v724 = vunpack.c.l.b16 %v596
  %v725 = vunpack.c.l.b16 %v597
  %v726 = vunpack.c.l.b16 %v598
  %v727 = vpack.c.b16 %v680, %v679
  %v728 = vpack.c.b16 %v682, %v681
  %v729 = vpack.c.b16 %v684, %v683
  %v730 = vpack.c.b16 %v686, %v685
  %v731 = vpack.c.b16 %v688, %v687
  %v732 = vpack.c.b16 %v690, %v689
  %v733 = vpack.c.b16 %v692, %v691
  %v734 = vpack.c.b16 %v694, %v693
  %v735 = vpack.c.b16 %v696, %v695
  %v736 = vpack.c.b16 %v698, %v697
  %v737 = vpack.c.b16 %v700, %v699
  %v738 = vpack.c.b16 %v702, %v701
  %v739 = vpack.c.b16 %v704, %v703
  %v740 = vpack.c.b16 %v706, %v705
  %v741 = vpack.c.b16 %v708, %v707
  %v742 = vpack.c.b16 %v710, %v709
  %v743 = vpack.c.b16 %v712, %v711
  %v744 = vpack.c.b16 %v714, %v713
  %v745 = vpack.c.b16 %v716, %v715
  %v746 = vpack.c.b16 %v718, %v717
  %v747 = vpack.c.b16 %v720, %v719
  %v748 = vpack.c.b16 %v722, %v721
  %v749 = vpack.c.b16 %v724, %v723
  %v750 = vpack.c.b16 %v726, %v725
  %775 = vmatpush.bf16.msra.mxu0 %v734
  %776 = vmatpush.bf16.msra.mxu0 %v733
  %777 = vmatpush.bf16.msra.mxu0 %v732
  %778 = vmatpush.bf16.msra.mxu0 %v731
  %779 = vmatpush.bf16.msra.mxu0 %v730
  %780 = vmatpush.bf16.msra.mxu0 %v729
  %781 = vmatpush.bf16.msra.mxu0 %v728
  %782 = vmatpush.bf16.msra.mxu0 %v727
  %783 = vmatmul.bf16.gmra.mxu0 %v619
  %v784 = vpop.f32.mrf.mxu0
  %v785 = vadd.f32 0.0, %v784
  %v786 = vpop.f32.mrf.mxu0
  %v787 = vadd.f32 0.0, %v786
  %788 = vmatmul.bf16.gmra.mxu0 %v622
  %v789 = vpop.f32.mrf.mxu0
  %v790 = vadd.f32 0.0, %v789
  %v791 = vpop.f32.mrf.mxu0
  %v792 = vadd.f32 0.0, %v791
  %793 = vdwg.mxu0
  %794 = vmatpush.bf16.msra.mxu0 %v742
  %795 = vmatpush.bf16.msra.mxu0 %v741
  %796 = vmatpush.bf16.msra.mxu0 %v740
  %797 = vmatpush.bf16.msra.mxu0 %v739
  %798 = vmatpush.bf16.msra.mxu0 %v738
  %799 = vmatpush.bf16.msra.mxu0 %v737
  %800 = vmatpush.bf16.msra.mxu0 %v736
  %801 = vmatpush.bf16.msra.mxu0 %v735
  %802 = vmatmul.bf16.gmra.mxu0 %v620
  %v803 = vpop.f32.mrf.mxu0
  %v804 = vadd.f32 %v785, %v803
  %v805 = vpop.f32.mrf.mxu0
  %v806 = vadd.f32 %v787, %v805
  %807 = vmatmul.bf16.gmra.mxu0 %v623
  %v808 = vpop.f32.mrf.mxu0
  %v809 = vadd.f32 %v790, %v808
  %v810 = vpop.f32.mrf.mxu0
  %v811 = vadd.f32 %v792, %v810
  %812 = vdwg.mxu0
  %813 = vmatpush.bf16.msra.mxu0 %v750
  %814 = vmatpush.bf16.msra.mxu0 %v749
  %815 = vmatpush.bf16.msra.mxu0 %v748
  %816 = vmatpush.bf16.msra.mxu0 %v747
  %817 = vmatpush.bf16.msra.mxu0 %v746
  %818 = vmatpush.bf16.msra.mxu0 %v745
  %819 = vmatpush.bf16.msra.mxu0 %v744
  %820 = vmatpush.bf16.msra.mxu0 %v743
  %821 = vmatmul.bf16.gmra.mxu0 %v621
  %v822 = vpop.f32.mrf.mxu0
  %v823 = vadd.f32 %v804, %v822
  %v824 = vpop.f32.mrf.mxu0
  %v825 = vadd.f32 %v806, %v824
  %826 = vmatmul.bf16.gmra.mxu0 %v624
  %v827 = vpop.f32.mrf.mxu0
  %v828 = vadd.f32 %v809, %v827
  %v829 = vpop.f32.mrf.mxu0
  %v830 = vadd.f32 %v811, %v829
  %831 = vdwg.mxu0
  %v832 = vld [vmem:[%s5] sm:$0x1]
  %v834 = vperm.slane %v832, 0
  %v836 = vmul.f32 %v823, %v834
  %v837 = vmul.f32 %v825, %v834
  %v838 = vmul.f32 %v828, %v834
  %v839 = vmul.f32 %v830, %v834
  %v840 = vld [vmem:[%s6] sm:$0x1]
  %v842 = vperm.slane %v840, 0
  %v844 = vadd.f32 %v836, %v842
  %v845 = vadd.f32 %v837, %v842
  %v846 = vadd.f32 %v838, %v842
  %v847 = vadd.f32 %v839, %v842
  %v848 = vadd.f32 %v844, %v27
  %v849 = vadd.f32 %v845, %v28
  %v850 = vadd.f32 %v846, %v29
  %v851 = vadd.f32 %v847, %v30
  %v852 = vmax.f32 %v848, 0.0
  %v853 = vmax.f32 %v849, 0.0
  %v854 = vmax.f32 %v850, 0.0
  %v855 = vmax.f32 %v851, 0.0
  %856 = vst [vmem:[%s7] sm:$0xff] %v852
  %857 = vst [vmem:[%s7 + $0x8] sm:$0xff] %v853
  %858 = vst [vmem:[%s7 + $0x10] sm:$0xff] %v854
  %859 = vst [vmem:[%s7 + $0x18] sm:$0xff] %v855
  // Predicated region
  $region30: #{basic_block_apply.1} parent=0 // pred_check
    _
  $region31: #{basic_block_apply.1} parent=0 // pred_check_branch
    %861 = sbr.rel (0) target = $region33
  $region32: #{basic_block_apply.1} parent=0 // pred_region
    _
  $region33: #{basic_block_apply.1} parent=0 // pred_fallthru
    _
  // Predicated region
  $region34: #{basic_block_apply.1} parent=0 // pred_check
    _
  $region35: #{basic_block_apply.1} parent=0 // pred_check_branch
    %863 = sbr.rel (0) target = $region37
  $region36: #{basic_block_apply.1} parent=0 // pred_region
    _
  $region37: #{basic_block_apply.1} parent=0 // pred_fallthru
    _

</llo_original>
